<compile_context>
chip_gen: v7x
topology: tpu7x:2x2x1
jax: 0.10.0
libtpu: 0.0.40
codegen_flags: <defaults>
</compile_context>

<pallas_src>
import jax
import jax.numpy as jnp
from jax.experimental import pallas as pl
from jax.experimental.pallas import tpu as pltpu


def _round_up(x, m):
    return (x + m - 1) // m * m


def _discriminator_kernel(x_ref, w1_ref, b1_ref, w2_ref, b2_ref, w3_ref, b3_ref,
                          out_ref):
    # Layer 1: bf16 x bf16 matmul on the MXU, f32 accumulate; bias + LeakyReLU on
    # the f32 VPU path (v5e has no bf16 VPU).
    h1 = jnp.dot(x_ref[...], w1_ref[...], preferred_element_type=jnp.float32)
    h1 = h1 + b1_ref[...]
    h1 = jnp.where(h1 > 0, h1, 0.2 * h1)

    # Layer 2: same pattern (re-cast activation to bf16 for the MXU).
    h2 = jnp.dot(h1.astype(jnp.bfloat16), w2_ref[...],
                 preferred_element_type=jnp.float32)
    h2 = h2 + b2_ref[...]
    h2 = jnp.where(h2 > 0, h2, 0.2 * h2)

    # Layer 3 (256 -> 1): avoid a degenerate N=1 MXU matmul. VPU multiply by the
    # (1, 256) weight row, XLU lane reduce, scalar bias from SMEM.
    t = jnp.sum(h2 * w3_ref[...], axis=-1, keepdims=True) + b3_ref[0]  # (TILE_B, 1)

    # Sigmoid: exp on the EUP, approximate reciprocal also on the EUP slot.
    sig = pl.reciprocal(1.0 + jnp.exp(-t), approx=True)

    # Lane-dense store: broadcast across 128 lanes; wrapper slices column 0.
    out_ref[...] = jnp.broadcast_to(sig, out_ref.shape)


def discriminator_forward(img, params, *, tile_b=256):
    """img: (B, C, H, W) float32 -> validity: (B, 1) float32."""
    w1, b1, w2, b2, w3, b3 = params
    B = img.shape[0]
    x = img.reshape(B, -1).astype(jnp.float32)          # img.view(B, -1)
    D = x.shape[1]
    H1 = w1.shape[1]                                     # 512
    H2 = w2.shape[1]                                     # 256

    # Pad feature dim to a multiple of 128 (zero-padded w1 rows keep math exact).
    Dp = _round_up(D, 128)
    if Dp != D:
        x = jnp.pad(x, ((0, 0), (0, Dp - D)))
        w1 = jnp.pad(w1, ((0, Dp - D), (0, 0)))

    # Batch tiling: pad B up to a multiple of the tile (multiple of 8 sublanes).
    tb = min(tile_b, _round_up(B, 8))
    B_pad = _round_up(B, tb)
    if B_pad != B:
        x = jnp.pad(x, ((0, B_pad - B), (0, 0)))

    # bf16 operands for the MXU; everything elementwise stays f32.
    x_bf = x.astype(jnp.bfloat16)
    w1_bf = w1.astype(jnp.bfloat16)
    w2_bf = w2.astype(jnp.bfloat16)
    w3_row = w3.reshape(1, H2).astype(jnp.float32)       # used on the VPU, keep f32
    b3_s = b3.reshape(-1).astype(jnp.float32)            # (1,) scalar -> SMEM

    grid = (B_pad // tb,)
    out = pl.pallas_call(
        _discriminator_kernel,
        out_shape=jax.ShapeDtypeStruct((B_pad, 128), jnp.float32),
        grid=grid,
        in_specs=[
            pl.BlockSpec((tb, Dp), lambda i: (i, 0)),        # x: tiled over batch
            pl.BlockSpec((Dp, H1), lambda i: (0, 0)),        # w1: VMEM-resident
            pl.BlockSpec((1, H1), lambda i: (0, 0)),         # b1
            pl.BlockSpec((H1, H2), lambda i: (0, 0)),        # w2: VMEM-resident
            pl.BlockSpec((1, H2), lambda i: (0, 0)),         # b2
            pl.BlockSpec((1, H2), lambda i: (0, 0)),         # w3 row (VPU epilogue)
            pl.BlockSpec(memory_space=pltpu.MemorySpace.SMEM),  # b3 scalar
        ],
        out_specs=pl.BlockSpec((tb, 128), lambda i: (i, 0)),
        compiler_params=pltpu.CompilerParams(
            dimension_semantics=("parallel",),
            vmem_limit_bytes=64 * 1024 * 1024,
        ),
    )(x_bf, w1_bf, b1, w2_bf, b2, w3_row, b3_s)

    # Lane-dense (B_pad, 128) slab -> (B, 1) validity.
    return out[:B, :1]


def init_params(key, in_dim):
    """PyTorch nn.Linear default init: U(-1/sqrt(fan_in), 1/sqrt(fan_in))."""
    def linear(k, fan_in, fan_out):
        kw, kb = jax.random.split(k)
        bound = 1.0 / (fan_in ** 0.5)
        w = jax.random.uniform(kw, (fan_in, fan_out), jnp.float32, -bound, bound)
        b = jax.random.uniform(kb, (1, fan_out), jnp.float32, -bound, bound)
        return w, b

    k1, k2, k3 = jax.random.split(key, 3)
    w1, b1 = linear(k1, in_dim, 512)
    w2, b2 = linear(k2, 512, 256)
    w3, b3 = linear(k3, 256, 1)
    return (w1, b1, w2, b2, w3, b3)


def _reference_forward(img, params):
    """Pure-JAX f32 reference for a correctness sanity check."""
    w1, b1, w2, b2, w3, b3 = params
    x = img.reshape(img.shape[0], -1)
    h = x @ w1 + b1
    h = jnp.where(h > 0, h, 0.2 * h)
    h = h @ w2 + b2
    h = jnp.where(h > 0, h, 0.2 * h)
    h = h @ w3 + b3
    return jax.nn.sigmoid(h)


if __name__ == "__main__":
    # Small, module-consistent shapes: channels=1, img_size=16 -> in_dim = 256.
    B, C, H, W = 8, 1, 16, 16
    key = jax.random.PRNGKey(0)
    k_img, k_params = jax.random.split(key)

    img = jax.random.normal(k_img, (B, C, H, W), dtype=jnp.float32)
    params = init_params(k_params, C * H * W)

    out = discriminator_forward(img, params)
    out = jax.block_until_ready(out)

    ref = _reference_forward(img, params)
    assert out.shape == (B, 1)
    # bf16 matmul operands + approx reciprocal -> loosened tolerance vs f32 ref.
    assert jnp.allclose(out, ref, atol=2e-2, rtol=2e-2), \
        float(jnp.max(jnp.abs(out - ref)))

    print("KERNEL_OK")
</pallas_src>

<mosaic_0001>
module attributes {stable_mosaic.version = 11 : i64} {
  func.func @_discriminator_kernel(%arg0: i32, %arg1: memref<8x256xbf16, #tpu.memory_space<vmem>>, %arg2: memref<256x512xbf16, #tpu.memory_space<vmem>>, %arg3: memref<1x512xf32, #tpu.memory_space<vmem>>, %arg4: memref<512x256xbf16, #tpu.memory_space<vmem>>, %arg5: memref<1x256xf32, #tpu.memory_space<vmem>>, %arg6: memref<1x256xf32, #tpu.memory_space<vmem>>, %arg7: memref<1xf32, #tpu.memory_space<smem>>, %arg8: memref<8x128xf32, #tpu.memory_space<vmem>>) attributes {dimension_semantics = [#tpu.dimension_semantics<parallel>], iteration_bounds = array<i64: 1>, scalar_prefetch = 0 : i64, scratch_operands = 0 : i64, tpu.core_type = #tpu.core_type<tc>, window_params = [{transform_indices = @transform_0, window_bounds = array<i64: 8, 256>}, {pipeline_mode = #tpu.pipeline_mode<synchronous>, transform_indices = @transform_1, window_bounds = array<i64: 256, 512>}, {pipeline_mode = #tpu.pipeline_mode<synchronous>, transform_indices = @transform_2, window_bounds = array<i64: 1, 512>}, {pipeline_mode = #tpu.pipeline_mode<synchronous>, transform_indices = @transform_3, window_bounds = array<i64: 512, 256>}, {pipeline_mode = #tpu.pipeline_mode<synchronous>, transform_indices = @transform_4, window_bounds = array<i64: 1, 256>}, {pipeline_mode = #tpu.pipeline_mode<synchronous>, transform_indices = @transform_5, window_bounds = array<i64: 1, 256>}, {transform_indices = @transform_6, window_bounds = array<i64: 1>}, {transform_indices = @transform_7, window_bounds = array<i64: 8, 128>}]} {
    %c0 = arith.constant 0 : index
    %c0_0 = arith.constant 0 : index
    %0 = vector.load %arg1[%c0, %c0_0] : memref<8x256xbf16, #tpu.memory_space<vmem>>, vector<8x256xbf16>
    %c0_1 = arith.constant 0 : index
    %c0_2 = arith.constant 0 : index
    %1 = vector.load %arg2[%c0_1, %c0_2] : memref<256x512xbf16, #tpu.memory_space<vmem>>, vector<256x512xbf16>
    %cst = arith.constant dense<0.000000e+00> : vector<8x512xf32>
    %2 = tpu.matmul %0, %1, %cst {dimension_numbers = #tpu.dot_dimension_numbers<[1], [0], [0], [1], [0, 0, 1, 1], [], []>} : vector<8x256xbf16>, vector<256x512xbf16>, vector<8x512xf32> -> vector<8x512xf32>
    %c0_3 = arith.constant 0 : index
    %c0_4 = arith.constant 0 : index
    %3 = vector.load %arg3[%c0_3, %c0_4] : memref<1x512xf32, #tpu.memory_space<vmem>>, vector<1x512xf32>
    %4 = vector.broadcast %3 : vector<1x512xf32> to vector<8x512xf32>
    %5 = arith.addf %2, %4 : vector<8x512xf32>
    %cst_5 = arith.constant 0.000000e+00 : f32
    %6 = vector.broadcast %cst_5 : f32 to vector<8x512xf32>
    %7 = arith.cmpf ogt, %5, %6 : vector<8x512xf32>
    %cst_6 = arith.constant 2.000000e-01 : f32
    %8 = vector.broadcast %cst_6 : f32 to vector<8x512xf32>
    %9 = arith.mulf %8, %5 : vector<8x512xf32>
    %10 = arith.select %7, %5, %9 : vector<8x512xi1>, vector<8x512xf32>
    %11 = arith.truncf %10 : vector<8x512xf32> to vector<8x512xbf16>
    %c0_7 = arith.constant 0 : index
    %c0_8 = arith.constant 0 : index
    %12 = vector.load %arg4[%c0_7, %c0_8] : memref<512x256xbf16, #tpu.memory_space<vmem>>, vector<512x256xbf16>
    %cst_9 = arith.constant dense<0.000000e+00> : vector<8x256xf32>
    %13 = tpu.matmul %11, %12, %cst_9 {dimension_numbers = #tpu.dot_dimension_numbers<[1], [0], [0], [1], [0, 0, 1, 1], [], []>} : vector<8x512xbf16>, vector<512x256xbf16>, vector<8x256xf32> -> vector<8x256xf32>
    %c0_10 = arith.constant 0 : index
    %c0_11 = arith.constant 0 : index
    %14 = vector.load %arg5[%c0_10, %c0_11] : memref<1x256xf32, #tpu.memory_space<vmem>>, vector<1x256xf32>
    %15 = vector.broadcast %14 : vector<1x256xf32> to vector<8x256xf32>
    %16 = arith.addf %13, %15 : vector<8x256xf32>
    %cst_12 = arith.constant 0.000000e+00 : f32
    %17 = vector.broadcast %cst_12 : f32 to vector<8x256xf32>
    %18 = arith.cmpf ogt, %16, %17 : vector<8x256xf32>
    %cst_13 = arith.constant 2.000000e-01 : f32
    %19 = vector.broadcast %cst_13 : f32 to vector<8x256xf32>
    %20 = arith.mulf %19, %16 : vector<8x256xf32>
    %21 = arith.select %18, %16, %20 : vector<8x256xi1>, vector<8x256xf32>
    %c0_14 = arith.constant 0 : index
    %c0_15 = arith.constant 0 : index
    %22 = vector.load %arg6[%c0_14, %c0_15] : memref<1x256xf32, #tpu.memory_space<vmem>>, vector<1x256xf32>
    %23 = vector.broadcast %22 : vector<1x256xf32> to vector<8x256xf32>
    %24 = arith.mulf %21, %23 : vector<8x256xf32>
    %cst_16 = arith.constant dense<0.000000e+00> : vector<8xf32>
    %25 = vector.multi_reduction <add>, %24, %cst_16 [1] : vector<8x256xf32> to vector<8xf32>
    %26 = vector.shape_cast %25 : vector<8xf32> to vector<8x1xf32>
    %c0_17 = arith.constant 0 : index
    %27 = memref.load %arg7[%c0_17] : memref<1xf32, #tpu.memory_space<smem>>
    %28 = vector.broadcast %27 : f32 to vector<8x1xf32>
    %29 = arith.addf %26, %28 : vector<8x1xf32>
    %cst_18 = arith.constant 0.000000e+00 : f32
    %30 = vector.broadcast %cst_18 : f32 to vector<8x1xf32>
    %31 = arith.subf %30, %29 : vector<8x1xf32>
    %32 = math.exp %31 : vector<8x1xf32>
    %cst_19 = arith.constant 1.000000e+00 : f32
    %33 = vector.broadcast %cst_19 : f32 to vector<8x1xf32>
    %34 = arith.addf %33, %32 : vector<8x1xf32>
    %35 = tpu.reciprocal %34 {approx = true} : vector<8x1xf32> -> vector<8x1xf32>
    %36 = vector.shape_cast %35 : vector<8x1xf32> to vector<8x1xf32>
    %37 = vector.broadcast %36 : vector<8x1xf32> to vector<8x128xf32>
    %c0_20 = arith.constant 0 : index
    %c0_21 = arith.constant 0 : index
    %38 = vector.load %arg8[%c0_20, %c0_21] : memref<8x128xf32, #tpu.memory_space<vmem>>, vector<8x128xf32>
    tpu.vector_store %arg8[%c0_20, %c0_21], %37 {strides = array<i32>} : memref<8x128xf32, #tpu.memory_space<vmem>>, vector<8x128xf32>,
    return
  }
  func.func @transform_0(%arg0: i32) -> (i32, i32) {
    %c0_i32 = arith.constant 0 : i32
    %c0_i32_0 = arith.constant 0 : i32
    return %arg0, %c0_i32 : i32, i32
  }
  func.func @transform_1(%arg0: i32) -> (i32, i32) {
    %c0_i32 = arith.constant 0 : i32
    %c0_i32_0 = arith.constant 0 : i32
    %c0_i32_1 = arith.constant 0 : i32
    return %c0_i32, %c0_i32_0 : i32, i32
  }
  func.func @transform_2(%arg0: i32) -> (i32, i32) {
    %c0_i32 = arith.constant 0 : i32
    %c0_i32_0 = arith.constant 0 : i32
    %c0_i32_1 = arith.constant 0 : i32
    return %c0_i32, %c0_i32_0 : i32, i32
  }
  func.func @transform_3(%arg0: i32) -> (i32, i32) {
    %c0_i32 = arith.constant 0 : i32
    %c0_i32_0 = arith.constant 0 : i32
    %c0_i32_1 = arith.constant 0 : i32
    return %c0_i32, %c0_i32_0 : i32, i32
  }
  func.func @transform_4(%arg0: i32) -> (i32, i32) {
    %c0_i32 = arith.constant 0 : i32
    %c0_i32_0 = arith.constant 0 : i32
    %c0_i32_1 = arith.constant 0 : i32
    return %c0_i32, %c0_i32_0 : i32, i32
  }
  func.func @transform_5(%arg0: i32) -> (i32, i32) {
    %c0_i32 = arith.constant 0 : i32
    %c0_i32_0 = arith.constant 0 : i32
    %c0_i32_1 = arith.constant 0 : i32
    return %c0_i32, %c0_i32_0 : i32, i32
  }
  func.func @transform_6(%arg0: i32) -> i32 {
    %c0_i32 = arith.constant 0 : i32
    %c0_i32_0 = arith.constant 0 : i32
    return %c0_i32 : i32
  }
  func.func @transform_7(%arg0: i32) -> (i32, i32) {
    %c0_i32 = arith.constant 0 : i32
    %c0_i32_0 = arith.constant 0 : i32
    return %arg0, %c0_i32 : i32, i32
  }
}

</mosaic_0001>

<llo_original>
// kernel: tpu_custom_call.1
$region0: #{tpu_custom_call.1}
  #allocation0 [shape = 'u32[]', space=smem, size = 0x4, offset = 0x4, fixed_abs, tag = 'smem constant byte address 0x4 - core index']
  #allocation1 [shape = 'u32[144,128]{1,0:T(1,128)}', space=vmem, size = 0x12000, scoped, tag = 'internal scratch']
  #allocation2 [shape = 'f32[1]{0:T(128)S(6)}', space=smem, size = 0x200, scoped, tag = 'scoped memory for tpu_custom_call.1']
  %s0 = inlined_call_operand.hbm [shape: bf16[8,256], index: 0, kind: input, shape index: {}]
  %s1 = inlined_call_operand.hbm [shape: bf16[256,512], index: 1, kind: input, shape index: {}]
  %s2 = inlined_call_operand.hbm [shape: f32[1,512], index: 2, kind: input, shape index: {}]
  %s3 = inlined_call_operand.hbm [shape: bf16[512,256], index: 3, kind: input, shape index: {}]
  %s4 = inlined_call_operand.hbm [shape: f32[1,256], index: 4, kind: input, shape index: {}]
  %s5 = inlined_call_operand.hbm [shape: f32[1,256], index: 5, kind: input, shape index: {}]
  %s6 = inlined_call_operand.<no memory space> [shape: f32[1], index: 6, kind: input, shape index: {}]
  %s7 = inlined_call_operand.hbm [shape: f32[8,128], index: 7, kind: output, shape index: {}]
  %s8 = sld [smem:[#allocation0]]
  $region62: #{tpu_custom_call.1} parent=0
    _
  %s10 = ssub.s32 1, %s8
  %s11 = scalar_select 0, %s10, %s8
  %12 = sst [smem:[#allocation2]] %s6
  $region1: #{tpu_custom_call.1} parent=0
    #allocation3 [shape = 'u8[4096]{0}', space=vmem, size = 0x1000, scoped, tag = 'input window, operand 0, single buffered']
    #allocation4 [shape = 's32[1]{0}', space=sflag, size = 0x4, scoped, tag = 'scoped memory for tpu_custom_call.1']
    #allocation5 [shape = 's32[1]{0}', space=sflag, size = 0x4, scoped, tag = 'scoped memory for tpu_custom_call.1']
    #allocation6 [shape = 'u8[262144]{0}', space=vmem, size = 0x40000, scoped, tag = 'input window, operand 1, single buffered']
    #allocation7 [shape = 's32[1]{0}', space=sflag, size = 0x4, scoped, tag = 'scoped memory for tpu_custom_call.1']
    #allocation8 [shape = 'u8[2048]{0}', space=vmem, size = 0x800, scoped, tag = 'input window, operand 2, single buffered']
    #allocation9 [shape = 'u8[262144]{0}', space=vmem, size = 0x40000, scoped, tag = 'input window, operand 3, single buffered']
    #allocation10 [shape = 's32[1]{0}', space=sflag, size = 0x4, scoped, tag = 'scoped memory for tpu_custom_call.1']
    #allocation11 [shape = 'u8[1024]{0}', space=vmem, size = 0x400, scoped, tag = 'input window, operand 4, single buffered']
    #allocation12 [shape = 'u8[1024]{0}', space=vmem, size = 0x400, scoped, tag = 'input window, operand 5, single buffered']
    #allocation13 [shape = 's32[1]{0}', space=sflag, size = 0x4, scoped, tag = 'scoped memory for tpu_custom_call.1']
    #allocation14 [shape = 'u8[4096]{0}', space=vmem, size = 0x1000, scoped, tag = 'output window, operand 0, single buffered']
    %13 = vsyncpa [#allocation4], 0
    %14 = vsyncpa [#allocation7], 0
    %15 = vsyncpa [#allocation10], 0
    %16 = vsyncpa [#allocation13], 0
    %17 = vsyncpa [#allocation5], 0
    // Predicated region
    $region2: #{tpu_custom_call.1} parent=1 // pred_check
      _
    $region3: #{tpu_custom_call.1} parent=1 // pred_check_branch
      %19 = sbr.rel (0) target = $region5
    $region4: #{tpu_custom_call.1} parent=1 // pred_region
      %s21 = ssub.s32 128, 128
      %22 = vsyncadd [#allocation4], %s21
      %s24 = sshll.u32 [#allocation3], 4
      %s25 = int_to_ptr.vmem [resolvable:$true] %s24
      %27 = dma.hbm_to_vmem [thread:$0]  %s0, 128, %s25, [#allocation4]
    $region5: #{tpu_custom_call.1} parent=1 // pred_fallthru
      _
    // Predicated region
    $region6: #{tpu_custom_call.1} parent=1 // pred_check
      _
    $region7: #{tpu_custom_call.1} parent=1 // pred_check_branch
      %29 = sbr.rel (0) target = $region9
    $region8: #{tpu_custom_call.1} parent=1 // pred_region
      %s31 = ssub.s32 8192, 8192
      %32 = vsyncadd [#allocation7], %s31
      %s33 = sshll.u32 [#allocation6], 4
      %s34 = int_to_ptr.vmem [resolvable:$true] %s33
      %39 = dma.hbm_to_vmem [thread:$0]  %s1, 8192, %s34, [#allocation7], 256, 256, 16
    $region9: #{tpu_custom_call.1} parent=1 // pred_fallthru
      _
    // Predicated region
    $region10: #{tpu_custom_call.1} parent=1 // pred_check
      _
    $region11: #{tpu_custom_call.1} parent=1 // pred_check_branch
      %41 = sbr.rel (0) target = $region13
    $region12: #{tpu_custom_call.1} parent=1 // pred_region
      %s43 = ssub.s32 64, 64
      %44 = vsyncadd [#allocation7], %s43
      %s46 = sshll.u32 [#allocation8], 4
      %s47 = int_to_ptr.vmem [resolvable:$true] %s46
      %49 = dma.hbm_to_vmem [thread:$0]  %s2, 64, %s47, [#allocation7]
    $region13: #{tpu_custom_call.1} parent=1 // pred_fallthru
      _
    // Predicated region
    $region14: #{tpu_custom_call.1} parent=1 // pred_check
      _
    $region15: #{tpu_custom_call.1} parent=1 // pred_check_branch
      %51 = sbr.rel (0) target = $region17
    $region16: #{tpu_custom_call.1} parent=1 // pred_region
      %s53 = ssub.s32 8192, 8192
      %54 = vsyncadd [#allocation10], %s53
      %s55 = sshll.u32 [#allocation9], 4
      %s56 = int_to_ptr.vmem [resolvable:$true] %s55
      %61 = dma.hbm_to_vmem [thread:$0]  %s3, 8192, %s56, [#allocation10], 128, 128, 8
    $region17: #{tpu_custom_call.1} parent=1 // pred_fallthru
      _
    // Predicated region
    $region18: #{tpu_custom_call.1} parent=1 // pred_check
      _
    $region19: #{tpu_custom_call.1} parent=1 // pred_check_branch
      %63 = sbr.rel (0) target = $region21
    $region20: #{tpu_custom_call.1} parent=1 // pred_region
      %s65 = ssub.s32 32, 32
      %66 = vsyncadd [#allocation10], %s65
      %s68 = sshll.u32 [#allocation11], 4
      %s69 = int_to_ptr.vmem [resolvable:$true] %s68
      %71 = dma.hbm_to_vmem [thread:$0]  %s4, 32, %s69, [#allocation10]
    $region21: #{tpu_custom_call.1} parent=1 // pred_fallthru
      _
    // Predicated region
    $region22: #{tpu_custom_call.1} parent=1 // pred_check
      _
    $region23: #{tpu_custom_call.1} parent=1 // pred_check_branch
      %73 = sbr.rel (0) target = $region25
    $region24: #{tpu_custom_call.1} parent=1 // pred_region
      %s75 = ssub.s32 32, 32
      %76 = vsyncadd [#allocation13], %s75
      %s78 = sshll.u32 [#allocation12], 4
      %s79 = int_to_ptr.vmem [resolvable:$true] %s78
      %81 = dma.hbm_to_vmem [thread:$0]  %s5, 32, %s79, [#allocation13]
    $region25: #{tpu_custom_call.1} parent=1 // pred_fallthru
      _
    // Predicated region
    $region26: #{tpu_custom_call.1} parent=1 // pred_check
      _
    $region27: #{tpu_custom_call.1} parent=1 // pred_check_branch
      %83 = sbr.rel (0) target = $region29
    $region28: #{tpu_custom_call.1} parent=1 // pred_region
      _
    $region29: #{tpu_custom_call.1} parent=1 // pred_fallthru
      _
    // Predicated region
    $region30: #{tpu_custom_call.1} parent=1 // pred_check
      _
    $region31: #{tpu_custom_call.1} parent=1 // pred_check_branch
      %85 = sbr.rel (0) target = $region33
    $region32: #{tpu_custom_call.1} parent=1 // pred_region
      %86 = dma.done [#allocation4], 128
    $region33: #{tpu_custom_call.1} parent=1 // pred_fallthru
      _
    // Predicated region
    $region34: #{tpu_custom_call.1} parent=1 // pred_check
      _
    $region35: #{tpu_custom_call.1} parent=1 // pred_check_branch
      %88 = sbr.rel (0) target = $region37
    $region36: #{tpu_custom_call.1} parent=1 // pred_region
      %89 = dma.done [#allocation7], 8192
    $region37: #{tpu_custom_call.1} parent=1 // pred_fallthru
      _
    // Predicated region
    $region38: #{tpu_custom_call.1} parent=1 // pred_check
      _
    $region39: #{tpu_custom_call.1} parent=1 // pred_check_branch
      %91 = sbr.rel (0) target = $region41
    $region40: #{tpu_custom_call.1} parent=1 // pred_region
      %92 = dma.done [#allocation7], 64
    $region41: #{tpu_custom_call.1} parent=1 // pred_fallthru
      _
    // Predicated region
    $region42: #{tpu_custom_call.1} parent=1 // pred_check
      _
    $region43: #{tpu_custom_call.1} parent=1 // pred_check_branch
      %94 = sbr.rel (0) target = $region45
    $region44: #{tpu_custom_call.1} parent=1 // pred_region
      %95 = dma.done [#allocation10], 8192
    $region45: #{tpu_custom_call.1} parent=1 // pred_fallthru
      _
    // Predicated region
    $region46: #{tpu_custom_call.1} parent=1 // pred_check
      _
    $region47: #{tpu_custom_call.1} parent=1 // pred_check_branch
      %97 = sbr.rel (0) target = $region49
    $region48: #{tpu_custom_call.1} parent=1 // pred_region
      %98 = dma.done [#allocation10], 32
    $region49: #{tpu_custom_call.1} parent=1 // pred_fallthru
      _
    // Predicated region
    $region50: #{tpu_custom_call.1} parent=1 // pred_check
      _
    $region51: #{tpu_custom_call.1} parent=1 // pred_check_branch
      %100 = sbr.rel (0) target = $region53
    $region52: #{tpu_custom_call.1} parent=1 // pred_region
      %101 = dma.done [#allocation13], 32
    $region53: #{tpu_custom_call.1} parent=1 // pred_fallthru
      _
    %v102 = vld [vmem:[#allocation3] sm:$0xff]
    %v103 = vld [vmem:[#allocation6] sm:$0xff]
    %v104 = vld [vmem:[#allocation6 + $0x8] sm:$0xff]
    %v105 = vld [vmem:[#allocation6 + $0x10] sm:$0xff]
    %v106 = vld [vmem:[#allocation6 + $0x18] sm:$0xff]
    %v107 = vld [vmem:[#allocation6 + $0x20] sm:$0xff]
    %v108 = vld [vmem:[#allocation6 + $0x28] sm:$0xff]
    %v109 = vld [vmem:[#allocation6 + $0x30] sm:$0xff]
    %v110 = vld [vmem:[#allocation6 + $0x38] sm:$0xff]
    %v111 = vld [vmem:[#allocation6 + $0x40] sm:$0xff]
    %v112 = vld [vmem:[#allocation6 + $0x48] sm:$0xff]
    %v113 = vld [vmem:[#allocation6 + $0x50] sm:$0xff]
    %v114 = vld [vmem:[#allocation6 + $0x58] sm:$0xff]
    %v115 = vld [vmem:[#allocation6 + $0x60] sm:$0xff]
    %v116 = vld [vmem:[#allocation6 + $0x68] sm:$0xff]
    %v117 = vld [vmem:[#allocation6 + $0x70] sm:$0xff]
    %v118 = vld [vmem:[#allocation6 + $0x78] sm:$0xff]
    %v119 = vld [vmem:[#allocation6 + $0x80] sm:$0xff]
    %v120 = vld [vmem:[#allocation6 + $0x88] sm:$0xff]
    %v121 = vld [vmem:[#allocation6 + $0x90] sm:$0xff]
    %v122 = vld [vmem:[#allocation6 + $0x98] sm:$0xff]
    %v123 = vld [vmem:[#allocation6 + $0xa0] sm:$0xff]
    %v124 = vld [vmem:[#allocation6 + $0xa8] sm:$0xff]
    %v125 = vld [vmem:[#allocation6 + $0xb0] sm:$0xff]
    %v126 = vld [vmem:[#allocation6 + $0xb8] sm:$0xff]
    %v127 = vld [vmem:[#allocation6 + $0xc0] sm:$0xff]
    %v128 = vld [vmem:[#allocation6 + $0xc8] sm:$0xff]
    %v129 = vld [vmem:[#allocation6 + $0xd0] sm:$0xff]
    %v130 = vld [vmem:[#allocation6 + $0xd8] sm:$0xff]
    %v131 = vld [vmem:[#allocation6 + $0xe0] sm:$0xff]
    %v132 = vld [vmem:[#allocation6 + $0xe8] sm:$0xff]
    %v133 = vld [vmem:[#allocation6 + $0xf0] sm:$0xff]
    %v134 = vld [vmem:[#allocation6 + $0xf8] sm:$0xff]
    %v135 = vld [vmem:[#allocation6 + $0x100] sm:$0xff]
    %v136 = vld [vmem:[#allocation6 + $0x108] sm:$0xff]
    %v137 = vld [vmem:[#allocation6 + $0x110] sm:$0xff]
    %v138 = vld [vmem:[#allocation6 + $0x118] sm:$0xff]
    %v139 = vld [vmem:[#allocation6 + $0x120] sm:$0xff]
    %v140 = vld [vmem:[#allocation6 + $0x128] sm:$0xff]
    %v141 = vld [vmem:[#allocation6 + $0x130] sm:$0xff]
    %v142 = vld [vmem:[#allocation6 + $0x138] sm:$0xff]
    %v143 = vld [vmem:[#allocation6 + $0x140] sm:$0xff]
    %v144 = vld [vmem:[#allocation6 + $0x148] sm:$0xff]
    %v145 = vld [vmem:[#allocation6 + $0x150] sm:$0xff]
    %v146 = vld [vmem:[#allocation6 + $0x158] sm:$0xff]
    %v147 = vld [vmem:[#allocation6 + $0x160] sm:$0xff]
    %v148 = vld [vmem:[#allocation6 + $0x168] sm:$0xff]
    %v149 = vld [vmem:[#allocation6 + $0x170] sm:$0xff]
    %v150 = vld [vmem:[#allocation6 + $0x178] sm:$0xff]
    %v151 = vld [vmem:[#allocation6 + $0x180] sm:$0xff]
    %v152 = vld [vmem:[#allocation6 + $0x188] sm:$0xff]
    %v153 = vld [vmem:[#allocation6 + $0x190] sm:$0xff]
    %v154 = vld [vmem:[#allocation6 + $0x198] sm:$0xff]
    %v155 = vld [vmem:[#allocation6 + $0x1a0] sm:$0xff]
    %v156 = vld [vmem:[#allocation6 + $0x1a8] sm:$0xff]
    %v157 = vld [vmem:[#allocation6 + $0x1b0] sm:$0xff]
    %v158 = vld [vmem:[#allocation6 + $0x1b8] sm:$0xff]
    %v159 = vld [vmem:[#allocation6 + $0x1c0] sm:$0xff]
    %v160 = vld [vmem:[#allocation6 + $0x1c8] sm:$0xff]
    %v161 = vld [vmem:[#allocation6 + $0x1d0] sm:$0xff]
    %v162 = vld [vmem:[#allocation6 + $0x1d8] sm:$0xff]
    %v163 = vld [vmem:[#allocation6 + $0x1e0] sm:$0xff]
    %v164 = vld [vmem:[#allocation6 + $0x1e8] sm:$0xff]
    %v165 = vld [vmem:[#allocation6 + $0x1f0] sm:$0xff]
    %v166 = vld [vmem:[#allocation6 + $0x1f8] sm:$0xff]
    %v167 = vld [vmem:[#allocation8] sm:$0xf]
    %v169 = vlaneseq
    %v170 = vshrl.u32 %v169, 7
    %v171 = vsub.s32 0, %v170
    %v172 = vrot.slane %v167, %v171
    %v173 = vlaneseq
    %v174 = vshrl.u32 %v173, 7
    %v175 = vsub.s32 1, %v174
    %v176 = vrot.slane %v167, %v175
    %v177 = vlaneseq
    %v178 = vshrl.u32 %v177, 7
    %v179 = vsub.s32 2, %v178
    %v180 = vrot.slane %v167, %v179
    %v181 = vlaneseq
    %v182 = vshrl.u32 %v181, 7
    %v183 = vsub.s32 3, %v182
    %v184 = vrot.slane %v167, %v183
    %v190 = vunpack.c.l.b16 %v102
    %v191 = vunpack.c.h.b16 %v102
    %v192 = vpack.c.b16 %v190, %v190
    %v193 = vpack.c.b16 %v191, %v191
    %v260 = vunpack.c.l.b16 %v103
    %v261 = vunpack.c.h.b16 %v103
    %v262 = vunpack.c.l.b16 %v104
    %v263 = vunpack.c.h.b16 %v104
    %v264 = vunpack.c.l.b16 %v105
    %v265 = vunpack.c.h.b16 %v105
    %v266 = vunpack.c.l.b16 %v106
    %v267 = vunpack.c.h.b16 %v106
    %v268 = vunpack.c.l.b16 %v107
    %v269 = vunpack.c.h.b16 %v107
    %v270 = vunpack.c.l.b16 %v108
    %v271 = vunpack.c.h.b16 %v108
    %v272 = vunpack.c.l.b16 %v109
    %v273 = vunpack.c.h.b16 %v109
    %v274 = vunpack.c.l.b16 %v110
    %v275 = vunpack.c.h.b16 %v110
    %v276 = vunpack.c.l.b16 %v111
    %v277 = vunpack.c.h.b16 %v111
    %v278 = vunpack.c.l.b16 %v112
    %v279 = vunpack.c.h.b16 %v112
    %v280 = vunpack.c.l.b16 %v113
    %v281 = vunpack.c.h.b16 %v113
    %v282 = vunpack.c.l.b16 %v114
    %v283 = vunpack.c.h.b16 %v114
    %v284 = vunpack.c.l.b16 %v115
    %v285 = vunpack.c.h.b16 %v115
    %v286 = vunpack.c.l.b16 %v116
    %v287 = vunpack.c.h.b16 %v116
    %v288 = vunpack.c.l.b16 %v117
    %v289 = vunpack.c.h.b16 %v117
    %v290 = vunpack.c.l.b16 %v118
    %v291 = vunpack.c.h.b16 %v118
    %v292 = vunpack.c.l.b16 %v119
    %v293 = vunpack.c.h.b16 %v119
    %v294 = vunpack.c.l.b16 %v120
    %v295 = vunpack.c.h.b16 %v120
    %v296 = vunpack.c.l.b16 %v121
    %v297 = vunpack.c.h.b16 %v121
    %v298 = vunpack.c.l.b16 %v122
    %v299 = vunpack.c.h.b16 %v122
    %v300 = vunpack.c.l.b16 %v123
    %v301 = vunpack.c.h.b16 %v123
    %v302 = vunpack.c.l.b16 %v124
    %v303 = vunpack.c.h.b16 %v124
    %v304 = vunpack.c.l.b16 %v125
    %v305 = vunpack.c.h.b16 %v125
    %v306 = vunpack.c.l.b16 %v126
    %v307 = vunpack.c.h.b16 %v126
    %v308 = vunpack.c.l.b16 %v127
    %v309 = vunpack.c.h.b16 %v127
    %v310 = vunpack.c.l.b16 %v128
    %v311 = vunpack.c.h.b16 %v128
    %v312 = vunpack.c.l.b16 %v129
    %v313 = vunpack.c.h.b16 %v129
    %v314 = vunpack.c.l.b16 %v130
    %v315 = vunpack.c.h.b16 %v130
    %v316 = vunpack.c.l.b16 %v131
    %v317 = vunpack.c.h.b16 %v131
    %v318 = vunpack.c.l.b16 %v132
    %v319 = vunpack.c.h.b16 %v132
    %v320 = vunpack.c.l.b16 %v133
    %v321 = vunpack.c.h.b16 %v133
    %v322 = vunpack.c.l.b16 %v134
    %v323 = vunpack.c.h.b16 %v134
    %v324 = vunpack.c.l.b16 %v135
    %v325 = vunpack.c.h.b16 %v135
    %v326 = vunpack.c.l.b16 %v136
    %v327 = vunpack.c.h.b16 %v136
    %v328 = vunpack.c.l.b16 %v137
    %v329 = vunpack.c.h.b16 %v137
    %v330 = vunpack.c.l.b16 %v138
    %v331 = vunpack.c.h.b16 %v138
    %v332 = vunpack.c.l.b16 %v139
    %v333 = vunpack.c.h.b16 %v139
    %v334 = vunpack.c.l.b16 %v140
    %v335 = vunpack.c.h.b16 %v140
    %v336 = vunpack.c.l.b16 %v141
    %v337 = vunpack.c.h.b16 %v141
    %v338 = vunpack.c.l.b16 %v142
    %v339 = vunpack.c.h.b16 %v142
    %v340 = vunpack.c.l.b16 %v143
    %v341 = vunpack.c.h.b16 %v143
    %v342 = vunpack.c.l.b16 %v144
    %v343 = vunpack.c.h.b16 %v144
    %v344 = vunpack.c.l.b16 %v145
    %v345 = vunpack.c.h.b16 %v145
    %v346 = vunpack.c.l.b16 %v146
    %v347 = vunpack.c.h.b16 %v146
    %v348 = vunpack.c.l.b16 %v147
    %v349 = vunpack.c.h.b16 %v147
    %v350 = vunpack.c.l.b16 %v148
    %v351 = vunpack.c.h.b16 %v148
    %v352 = vunpack.c.l.b16 %v149
    %v353 = vunpack.c.h.b16 %v149
    %v354 = vunpack.c.l.b16 %v150
    %v355 = vunpack.c.h.b16 %v150
    %v356 = vunpack.c.l.b16 %v151
    %v357 = vunpack.c.h.b16 %v151
    %v358 = vunpack.c.l.b16 %v152
    %v359 = vunpack.c.h.b16 %v152
    %v360 = vunpack.c.l.b16 %v153
    %v361 = vunpack.c.h.b16 %v153
    %v362 = vunpack.c.l.b16 %v154
    %v363 = vunpack.c.h.b16 %v154
    %v364 = vunpack.c.l.b16 %v155
    %v365 = vunpack.c.h.b16 %v155
    %v366 = vunpack.c.l.b16 %v156
    %v367 = vunpack.c.h.b16 %v156
    %v368 = vunpack.c.l.b16 %v157
    %v369 = vunpack.c.h.b16 %v157
    %v370 = vunpack.c.l.b16 %v158
    %v371 = vunpack.c.h.b16 %v158
    %v372 = vunpack.c.l.b16 %v159
    %v373 = vunpack.c.h.b16 %v159
    %v374 = vunpack.c.l.b16 %v160
    %v375 = vunpack.c.h.b16 %v160
    %v376 = vunpack.c.l.b16 %v161
    %v377 = vunpack.c.h.b16 %v161
    %v378 = vunpack.c.l.b16 %v162
    %v379 = vunpack.c.h.b16 %v162
    %v380 = vunpack.c.l.b16 %v163
    %v381 = vunpack.c.h.b16 %v163
    %v382 = vunpack.c.l.b16 %v164
    %v383 = vunpack.c.h.b16 %v164
    %v384 = vunpack.c.l.b16 %v165
    %v385 = vunpack.c.h.b16 %v165
    %v386 = vunpack.c.l.b16 %v166
    %v387 = vunpack.c.h.b16 %v166
    %v388 = vpack.c.b16 %v264, %v260
    %v389 = vpack.c.b16 %v265, %v261
    %v390 = vpack.c.b16 %v266, %v262
    %v391 = vpack.c.b16 %v267, %v263
    %v392 = vpack.c.b16 %v272, %v268
    %v393 = vpack.c.b16 %v273, %v269
    %v394 = vpack.c.b16 %v274, %v270
    %v395 = vpack.c.b16 %v275, %v271
    %v396 = vpack.c.b16 %v280, %v276
    %v397 = vpack.c.b16 %v281, %v277
    %v398 = vpack.c.b16 %v282, %v278
    %v399 = vpack.c.b16 %v283, %v279
    %v400 = vpack.c.b16 %v288, %v284
    %v401 = vpack.c.b16 %v289, %v285
    %v402 = vpack.c.b16 %v290, %v286
    %v403 = vpack.c.b16 %v291, %v287
    %v404 = vpack.c.b16 %v296, %v292
    %v405 = vpack.c.b16 %v297, %v293
    %v406 = vpack.c.b16 %v298, %v294
    %v407 = vpack.c.b16 %v299, %v295
    %v408 = vpack.c.b16 %v304, %v300
    %v409 = vpack.c.b16 %v305, %v301
    %v410 = vpack.c.b16 %v306, %v302
    %v411 = vpack.c.b16 %v307, %v303
    %v412 = vpack.c.b16 %v312, %v308
    %v413 = vpack.c.b16 %v313, %v309
    %v414 = vpack.c.b16 %v314, %v310
    %v415 = vpack.c.b16 %v315, %v311
    %v416 = vpack.c.b16 %v320, %v316
    %v417 = vpack.c.b16 %v321, %v317
    %v418 = vpack.c.b16 %v322, %v318
    %v419 = vpack.c.b16 %v323, %v319
    %v420 = vpack.c.b16 %v328, %v324
    %v421 = vpack.c.b16 %v329, %v325
    %v422 = vpack.c.b16 %v330, %v326
    %v423 = vpack.c.b16 %v331, %v327
    %v424 = vpack.c.b16 %v336, %v332
    %v425 = vpack.c.b16 %v337, %v333
    %v426 = vpack.c.b16 %v338, %v334
    %v427 = vpack.c.b16 %v339, %v335
    %v428 = vpack.c.b16 %v344, %v340
    %v429 = vpack.c.b16 %v345, %v341
    %v430 = vpack.c.b16 %v346, %v342
    %v431 = vpack.c.b16 %v347, %v343
    %v432 = vpack.c.b16 %v352, %v348
    %v433 = vpack.c.b16 %v353, %v349
    %v434 = vpack.c.b16 %v354, %v350
    %v435 = vpack.c.b16 %v355, %v351
    %v436 = vpack.c.b16 %v360, %v356
    %v437 = vpack.c.b16 %v361, %v357
    %v438 = vpack.c.b16 %v362, %v358
    %v439 = vpack.c.b16 %v363, %v359
    %v440 = vpack.c.b16 %v368, %v364
    %v441 = vpack.c.b16 %v369, %v365
    %v442 = vpack.c.b16 %v370, %v366
    %v443 = vpack.c.b16 %v371, %v367
    %v444 = vpack.c.b16 %v376, %v372
    %v445 = vpack.c.b16 %v377, %v373
    %v446 = vpack.c.b16 %v378, %v374
    %v447 = vpack.c.b16 %v379, %v375
    %v448 = vpack.c.b16 %v384, %v380
    %v449 = vpack.c.b16 %v385, %v381
    %v450 = vpack.c.b16 %v386, %v382
    %v451 = vpack.c.b16 %v387, %v383
    %516 = vmatprep.subr.bf16.mxu0 %v389
    %517 = vmatpush1.bf16.msra.mxu0 %v388
    %518 = vmatprep.subr.bf16.mxu0 %v393
    %519 = vmatpush1.bf16.msra.mxu0 %v392
    %520 = vmatprep.subr.bf16.mxu0 %v397
    %521 = vmatpush1.bf16.msra.mxu0 %v396
    %522 = vmatprep.subr.bf16.mxu0 %v401
    %523 = vmatpush1.bf16.msra.mxu0 %v400
    %524 = vmatprep.subr.bf16.mxu0 %v405
    %525 = vmatpush1.bf16.msra.mxu0 %v404
    %526 = vmatprep.subr.bf16.mxu0 %v409
    %527 = vmatpush1.bf16.msra.mxu0 %v408
    %528 = vmatprep.subr.bf16.mxu0 %v413
    %529 = vmatpush1.bf16.msra.mxu0 %v412
    %530 = vmatprep.subr.bf16.mxu0 %v417
    %531 = vmatpush1.bf16.msra.mxu0 %v416
    %532 = vmatprep.subr.bf16.mxu0 %v421
    %533 = vmatpush1.bf16.msra.mxu0 %v420
    %534 = vmatprep.subr.bf16.mxu0 %v425
    %535 = vmatpush1.bf16.msra.mxu0 %v424
    %536 = vmatprep.subr.bf16.mxu0 %v429
    %537 = vmatpush1.bf16.msra.mxu0 %v428
    %538 = vmatprep.subr.bf16.mxu0 %v433
    %539 = vmatpush1.bf16.msra.mxu0 %v432
    %540 = vmatprep.subr.bf16.mxu0 %v437
    %541 = vmatpush1.bf16.msra.mxu0 %v436
    %542 = vmatprep.subr.bf16.mxu0 %v441
    %543 = vmatpush1.bf16.msra.mxu0 %v440
    %544 = vmatprep.subr.bf16.mxu0 %v445
    %545 = vmatpush1.bf16.msra.mxu0 %v444
    %546 = vmatprep.subr.bf16.mxu0 %v449
    %547 = vmatpush1.bf16.msra.mxu0 %v448
    %548 = vmatprep.mubr.bf16.mxu0 %v193
    %549 = vmatmul.mubr.bf16.gmra.mrb[0].mxu0 %v192
    %v550 = vpop.f32.mrb[0].mxu0
    %v551 = vadd.f32 %v172, %v550
    %v552 = vpop.f32.mrb[0].mxu0
    %v553 = vadd.f32 %v176, %v552
    %v554 = vpop.f32.mrb[0].mxu0
    %v555 = vpop.f32.mrb[0].mxu0
    %556 = vdwg.mxu0
    %557 = vmatprep.subr.bf16.mxu0 %v391
    %558 = vmatpush1.bf16.msra.mxu0 %v390
    %559 = vmatprep.subr.bf16.mxu0 %v395
    %560 = vmatpush1.bf16.msra.mxu0 %v394
    %561 = vmatprep.subr.bf16.mxu0 %v399
    %562 = vmatpush1.bf16.msra.mxu0 %v398
    %563 = vmatprep.subr.bf16.mxu0 %v403
    %564 = vmatpush1.bf16.msra.mxu0 %v402
    %565 = vmatprep.subr.bf16.mxu0 %v407
    %566 = vmatpush1.bf16.msra.mxu0 %v406
    %567 = vmatprep.subr.bf16.mxu0 %v411
    %568 = vmatpush1.bf16.msra.mxu0 %v410
    %569 = vmatprep.subr.bf16.mxu0 %v415
    %570 = vmatpush1.bf16.msra.mxu0 %v414
    %571 = vmatprep.subr.bf16.mxu0 %v419
    %572 = vmatpush1.bf16.msra.mxu0 %v418
    %573 = vmatprep.subr.bf16.mxu0 %v423
    %574 = vmatpush1.bf16.msra.mxu0 %v422
    %575 = vmatprep.subr.bf16.mxu0 %v427
    %576 = vmatpush1.bf16.msra.mxu0 %v426
    %577 = vmatprep.subr.bf16.mxu0 %v431
    %578 = vmatpush1.bf16.msra.mxu0 %v430
    %579 = vmatprep.subr.bf16.mxu0 %v435
    %580 = vmatpush1.bf16.msra.mxu0 %v434
    %581 = vmatprep.subr.bf16.mxu0 %v439
    %582 = vmatpush1.bf16.msra.mxu0 %v438
    %583 = vmatprep.subr.bf16.mxu0 %v443
    %584 = vmatpush1.bf16.msra.mxu0 %v442
    %585 = vmatprep.subr.bf16.mxu0 %v447
    %586 = vmatpush1.bf16.msra.mxu0 %v446
    %587 = vmatprep.subr.bf16.mxu0 %v451
    %588 = vmatpush1.bf16.msra.mxu0 %v450
    %589 = vmatprep.mubr.bf16.mxu0 %v193
    %590 = vmatmul.mubr.bf16.gmra.mrb[0].mxu0 %v192
    %v591 = vpop.f32.mrb[0].mxu0
    %v592 = vadd.f32 %v180, %v591
    %v593 = vpop.f32.mrb[0].mxu0
    %v594 = vadd.f32 %v184, %v593
    %v595 = vpop.f32.mrb[0].mxu0
    %v596 = vpop.f32.mrb[0].mxu0
    %597 = vdwg.mxu0
    %vm598 = vcmp.gt.f32.partialorder %v551, 0.0
    %vm599 = vcmp.gt.f32.partialorder %v553, 0.0
    %vm600 = vcmp.gt.f32.partialorder %v592, 0.0
    %vm601 = vcmp.gt.f32.partialorder %v594, 0.0
    %v602 = vmul.f32 %v551, 0.2
    %v603 = vmul.f32 %v553, 0.2
    %v604 = vmul.f32 %v592, 0.2
    %v605 = vmul.f32 %v594, 0.2
    %v606 = vsel %vm598, %v551, %v602
    %v607 = vsel %vm599, %v553, %v603
    %v608 = vsel %vm600, %v592, %v604
    %v609 = vsel %vm601, %v594, %v605
    %v610 = vpack.c.bf16 %v606, %v606
    %v611 = vpack.c.bf16 %v607, %v607
    %v612 = vpack.c.bf16 %v608, %v608
    %v613 = vpack.c.bf16 %v609, %v609
    %v614 = vld [vmem:[#allocation9] sm:$0xff]
    %v615 = vld [vmem:[#allocation9 + $0x8] sm:$0xff]
    %v616 = vld [vmem:[#allocation9 + $0x10] sm:$0xff]
    %v617 = vld [vmem:[#allocation9 + $0x18] sm:$0xff]
    %v618 = vld [vmem:[#allocation9 + $0x20] sm:$0xff]
    %v619 = vld [vmem:[#allocation9 + $0x28] sm:$0xff]
    %v620 = vld [vmem:[#allocation9 + $0x30] sm:$0xff]
    %v621 = vld [vmem:[#allocation9 + $0x38] sm:$0xff]
    %v622 = vld [vmem:[#allocation9 + $0x40] sm:$0xff]
    %v623 = vld [vmem:[#allocation9 + $0x48] sm:$0xff]
    %v624 = vld [vmem:[#allocation9 + $0x50] sm:$0xff]
    %v625 = vld [vmem:[#allocation9 + $0x58] sm:$0xff]
    %v626 = vld [vmem:[#allocation9 + $0x60] sm:$0xff]
    %v627 = vld [vmem:[#allocation9 + $0x68] sm:$0xff]
    %v628 = vld [vmem:[#allocation9 + $0x70] sm:$0xff]
    %v629 = vld [vmem:[#allocation9 + $0x78] sm:$0xff]
    %v630 = vld [vmem:[#allocation9 + $0x80] sm:$0xff]
    %v631 = vld [vmem:[#allocation9 + $0x88] sm:$0xff]
    %v632 = vld [vmem:[#allocation9 + $0x90] sm:$0xff]
    %v633 = vld [vmem:[#allocation9 + $0x98] sm:$0xff]
    %v634 = vld [vmem:[#allocation9 + $0xa0] sm:$0xff]
    %v635 = vld [vmem:[#allocation9 + $0xa8] sm:$0xff]
    %v636 = vld [vmem:[#allocation9 + $0xb0] sm:$0xff]
    %v637 = vld [vmem:[#allocation9 + $0xb8] sm:$0xff]
    %v638 = vld [vmem:[#allocation9 + $0xc0] sm:$0xff]
    %v639 = vld [vmem:[#allocation9 + $0xc8] sm:$0xff]
    %v640 = vld [vmem:[#allocation9 + $0xd0] sm:$0xff]
    %v641 = vld [vmem:[#allocation9 + $0xd8] sm:$0xff]
    %v642 = vld [vmem:[#allocation9 + $0xe0] sm:$0xff]
    %v643 = vld [vmem:[#allocation9 + $0xe8] sm:$0xff]
    %v644 = vld [vmem:[#allocation9 + $0xf0] sm:$0xff]
    %v645 = vld [vmem:[#allocation9 + $0xf8] sm:$0xff]
    %v646 = vld [vmem:[#allocation9 + $0x100] sm:$0xff]
    %v647 = vld [vmem:[#allocation9 + $0x108] sm:$0xff]
    %v648 = vld [vmem:[#allocation9 + $0x110] sm:$0xff]
    %v649 = vld [vmem:[#allocation9 + $0x118] sm:$0xff]
    %v650 = vld [vmem:[#allocation9 + $0x120] sm:$0xff]
    %v651 = vld [vmem:[#allocation9 + $0x128] sm:$0xff]
    %v652 = vld [vmem:[#allocation9 + $0x130] sm:$0xff]
    %v653 = vld [vmem:[#allocation9 + $0x138] sm:$0xff]
    %v654 = vld [vmem:[#allocation9 + $0x140] sm:$0xff]
    %v655 = vld [vmem:[#allocation9 + $0x148] sm:$0xff]
    %v656 = vld [vmem:[#allocation9 + $0x150] sm:$0xff]
    %v657 = vld [vmem:[#allocation9 + $0x158] sm:$0xff]
    %v658 = vld [vmem:[#allocation9 + $0x160] sm:$0xff]
    %v659 = vld [vmem:[#allocation9 + $0x168] sm:$0xff]
    %v660 = vld [vmem:[#allocation9 + $0x170] sm:$0xff]
    %v661 = vld [vmem:[#allocation9 + $0x178] sm:$0xff]
    %v662 = vld [vmem:[#allocation9 + $0x180] sm:$0xff]
    %v663 = vld [vmem:[#allocation9 + $0x188] sm:$0xff]
    %v664 = vld [vmem:[#allocation9 + $0x190] sm:$0xff]
    %v665 = vld [vmem:[#allocation9 + $0x198] sm:$0xff]
    %v666 = vld [vmem:[#allocation9 + $0x1a0] sm:$0xff]
    %v667 = vld [vmem:[#allocation9 + $0x1a8] sm:$0xff]
    %v668 = vld [vmem:[#allocation9 + $0x1b0] sm:$0xff]
    %v669 = vld [vmem:[#allocation9 + $0x1b8] sm:$0xff]
    %v670 = vld [vmem:[#allocation9 + $0x1c0] sm:$0xff]
    %v671 = vld [vmem:[#allocation9 + $0x1c8] sm:$0xff]
    %v672 = vld [vmem:[#allocation9 + $0x1d0] sm:$0xff]
    %v673 = vld [vmem:[#allocation9 + $0x1d8] sm:$0xff]
    %v674 = vld [vmem:[#allocation9 + $0x1e0] sm:$0xff]
    %v675 = vld [vmem:[#allocation9 + $0x1e8] sm:$0xff]
    %v676 = vld [vmem:[#allocation9 + $0x1f0] sm:$0xff]
    %v677 = vld [vmem:[#allocation9 + $0x1f8] sm:$0xff]
    %v678 = vld [vmem:[#allocation11] sm:$0x3]
    %v680 = vlaneseq
    %v681 = vshrl.u32 %v680, 7
    %v682 = vsub.s32 0, %v681
    %v683 = vrot.slane %v678, %v682
    %v684 = vlaneseq
    %v685 = vshrl.u32 %v684, 7
    %v686 = vsub.s32 1, %v685
    %v687 = vrot.slane %v678, %v686
    %v754 = vunpack.c.l.b16 %v614
    %v755 = vunpack.c.h.b16 %v614
    %v756 = vunpack.c.l.b16 %v615
    %v757 = vunpack.c.h.b16 %v615
    %v758 = vunpack.c.l.b16 %v616
    %v759 = vunpack.c.h.b16 %v616
    %v760 = vunpack.c.l.b16 %v617
    %v761 = vunpack.c.h.b16 %v617
    %v762 = vunpack.c.l.b16 %v618
    %v763 = vunpack.c.h.b16 %v618
    %v764 = vunpack.c.l.b16 %v619
    %v765 = vunpack.c.h.b16 %v619
    %v766 = vunpack.c.l.b16 %v620
    %v767 = vunpack.c.h.b16 %v620
    %v768 = vunpack.c.l.b16 %v621
    %v769 = vunpack.c.h.b16 %v621
    %v770 = vunpack.c.l.b16 %v622
    %v771 = vunpack.c.h.b16 %v622
    %v772 = vunpack.c.l.b16 %v623
    %v773 = vunpack.c.h.b16 %v623
    %v774 = vunpack.c.l.b16 %v624
    %v775 = vunpack.c.h.b16 %v624
    %v776 = vunpack.c.l.b16 %v625
    %v777 = vunpack.c.h.b16 %v625
    %v778 = vunpack.c.l.b16 %v626
    %v779 = vunpack.c.h.b16 %v626
    %v780 = vunpack.c.l.b16 %v627
    %v781 = vunpack.c.h.b16 %v627
    %v782 = vunpack.c.l.b16 %v628
    %v783 = vunpack.c.h.b16 %v628
    %v784 = vunpack.c.l.b16 %v629
    %v785 = vunpack.c.h.b16 %v629
    %v786 = vunpack.c.l.b16 %v630
    %v787 = vunpack.c.h.b16 %v630
    %v788 = vunpack.c.l.b16 %v631
    %v789 = vunpack.c.h.b16 %v631
    %v790 = vunpack.c.l.b16 %v632
    %v791 = vunpack.c.h.b16 %v632
    %v792 = vunpack.c.l.b16 %v633
    %v793 = vunpack.c.h.b16 %v633
    %v794 = vunpack.c.l.b16 %v634
    %v795 = vunpack.c.h.b16 %v634
    %v796 = vunpack.c.l.b16 %v635
    %v797 = vunpack.c.h.b16 %v635
    %v798 = vunpack.c.l.b16 %v636
    %v799 = vunpack.c.h.b16 %v636
    %v800 = vunpack.c.l.b16 %v637
    %v801 = vunpack.c.h.b16 %v637
    %v802 = vunpack.c.l.b16 %v638
    %v803 = vunpack.c.h.b16 %v638
    %v804 = vunpack.c.l.b16 %v639
    %v805 = vunpack.c.h.b16 %v639
    %v806 = vunpack.c.l.b16 %v640
    %v807 = vunpack.c.h.b16 %v640
    %v808 = vunpack.c.l.b16 %v641
    %v809 = vunpack.c.h.b16 %v641
    %v810 = vunpack.c.l.b16 %v642
    %v811 = vunpack.c.h.b16 %v642
    %v812 = vunpack.c.l.b16 %v643
    %v813 = vunpack.c.h.b16 %v643
    %v814 = vunpack.c.l.b16 %v644
    %v815 = vunpack.c.h.b16 %v644
    %v816 = vunpack.c.l.b16 %v645
    %v817 = vunpack.c.h.b16 %v645
    %v818 = vunpack.c.l.b16 %v646
    %v819 = vunpack.c.h.b16 %v646
    %v820 = vunpack.c.l.b16 %v647
    %v821 = vunpack.c.h.b16 %v647
    %v822 = vunpack.c.l.b16 %v648
    %v823 = vunpack.c.h.b16 %v648
    %v824 = vunpack.c.l.b16 %v649
    %v825 = vunpack.c.h.b16 %v649
    %v826 = vunpack.c.l.b16 %v650
    %v827 = vunpack.c.h.b16 %v650
    %v828 = vunpack.c.l.b16 %v651
    %v829 = vunpack.c.h.b16 %v651
    %v830 = vunpack.c.l.b16 %v652
    %v831 = vunpack.c.h.b16 %v652
    %v832 = vunpack.c.l.b16 %v653
    %v833 = vunpack.c.h.b16 %v653
    %v834 = vunpack.c.l.b16 %v654
    %v835 = vunpack.c.h.b16 %v654
    %v836 = vunpack.c.l.b16 %v655
    %v837 = vunpack.c.h.b16 %v655
    %v838 = vunpack.c.l.b16 %v656
    %v839 = vunpack.c.h.b16 %v656
    %v840 = vunpack.c.l.b16 %v657
    %v841 = vunpack.c.h.b16 %v657
    %v842 = vunpack.c.l.b16 %v658
    %v843 = vunpack.c.h.b16 %v658
    %v844 = vunpack.c.l.b16 %v659
    %v845 = vunpack.c.h.b16 %v659
    %v846 = vunpack.c.l.b16 %v660
    %v847 = vunpack.c.h.b16 %v660
    %v848 = vunpack.c.l.b16 %v661
    %v849 = vunpack.c.h.b16 %v661
    %v850 = vunpack.c.l.b16 %v662
    %v851 = vunpack.c.h.b16 %v662
    %v852 = vunpack.c.l.b16 %v663
    %v853 = vunpack.c.h.b16 %v663
    %v854 = vunpack.c.l.b16 %v664
    %v855 = vunpack.c.h.b16 %v664
    %v856 = vunpack.c.l.b16 %v665
    %v857 = vunpack.c.h.b16 %v665
    %v858 = vunpack.c.l.b16 %v666
    %v859 = vunpack.c.h.b16 %v666
    %v860 = vunpack.c.l.b16 %v667
    %v861 = vunpack.c.h.b16 %v667
    %v862 = vunpack.c.l.b16 %v668
    %v863 = vunpack.c.h.b16 %v668
    %v864 = vunpack.c.l.b16 %v669
    %v865 = vunpack.c.h.b16 %v669
    %v866 = vunpack.c.l.b16 %v670
    %v867 = vunpack.c.h.b16 %v670
    %v868 = vunpack.c.l.b16 %v671
    %v869 = vunpack.c.h.b16 %v671
    %v870 = vunpack.c.l.b16 %v672
    %v871 = vunpack.c.h.b16 %v672
    %v872 = vunpack.c.l.b16 %v673
    %v873 = vunpack.c.h.b16 %v673
    %v874 = vunpack.c.l.b16 %v674
    %v875 = vunpack.c.h.b16 %v674
    %v876 = vunpack.c.l.b16 %v675
    %v877 = vunpack.c.h.b16 %v675
    %v878 = vunpack.c.l.b16 %v676
    %v879 = vunpack.c.h.b16 %v676
    %v880 = vunpack.c.l.b16 %v677
    %v881 = vunpack.c.h.b16 %v677
    %v882 = vpack.c.b16 %v756, %v754
    %v883 = vpack.c.b16 %v757, %v755
    %v884 = vpack.c.b16 %v760, %v758
    %v885 = vpack.c.b16 %v761, %v759
    %v886 = vpack.c.b16 %v764, %v762
    %v887 = vpack.c.b16 %v765, %v763
    %v888 = vpack.c.b16 %v768, %v766
    %v889 = vpack.c.b16 %v769, %v767
    %v890 = vpack.c.b16 %v772, %v770
    %v891 = vpack.c.b16 %v773, %v771
    %v892 = vpack.c.b16 %v776, %v774
    %v893 = vpack.c.b16 %v777, %v775
    %v894 = vpack.c.b16 %v780, %v778
    %v895 = vpack.c.b16 %v781, %v779
    %v896 = vpack.c.b16 %v784, %v782
    %v897 = vpack.c.b16 %v785, %v783
    %v898 = vpack.c.b16 %v788, %v786
    %v899 = vpack.c.b16 %v789, %v787
    %v900 = vpack.c.b16 %v792, %v790
    %v901 = vpack.c.b16 %v793, %v791
    %v902 = vpack.c.b16 %v796, %v794
    %v903 = vpack.c.b16 %v797, %v795
    %v904 = vpack.c.b16 %v800, %v798
    %v905 = vpack.c.b16 %v801, %v799
    %v906 = vpack.c.b16 %v804, %v802
    %v907 = vpack.c.b16 %v805, %v803
    %v908 = vpack.c.b16 %v808, %v806
    %v909 = vpack.c.b16 %v809, %v807
    %v910 = vpack.c.b16 %v812, %v810
    %v911 = vpack.c.b16 %v813, %v811
    %v912 = vpack.c.b16 %v816, %v814
    %v913 = vpack.c.b16 %v817, %v815
    %v914 = vpack.c.b16 %v820, %v818
    %v915 = vpack.c.b16 %v821, %v819
    %v916 = vpack.c.b16 %v824, %v822
    %v917 = vpack.c.b16 %v825, %v823
    %v918 = vpack.c.b16 %v828, %v826
    %v919 = vpack.c.b16 %v829, %v827
    %v920 = vpack.c.b16 %v832, %v830
    %v921 = vpack.c.b16 %v833, %v831
    %v922 = vpack.c.b16 %v836, %v834
    %v923 = vpack.c.b16 %v837, %v835
    %v924 = vpack.c.b16 %v840, %v838
    %v925 = vpack.c.b16 %v841, %v839
    %v926 = vpack.c.b16 %v844, %v842
    %v927 = vpack.c.b16 %v845, %v843
    %v928 = vpack.c.b16 %v848, %v846
    %v929 = vpack.c.b16 %v849, %v847
    %v930 = vpack.c.b16 %v852, %v850
    %v931 = vpack.c.b16 %v853, %v851
    %v932 = vpack.c.b16 %v856, %v854
    %v933 = vpack.c.b16 %v857, %v855
    %v934 = vpack.c.b16 %v860, %v858
    %v935 = vpack.c.b16 %v861, %v859
    %v936 = vpack.c.b16 %v864, %v862
    %v937 = vpack.c.b16 %v865, %v863
    %v938 = vpack.c.b16 %v868, %v866
    %v939 = vpack.c.b16 %v869, %v867
    %v940 = vpack.c.b16 %v872, %v870
    %v941 = vpack.c.b16 %v873, %v871
    %v942 = vpack.c.b16 %v876, %v874
    %v943 = vpack.c.b16 %v877, %v875
    %v944 = vpack.c.b16 %v880, %v878
    %v945 = vpack.c.b16 %v881, %v879
    %1010 = vmatprep.subr.bf16.mxu0 %v883
    %1011 = vmatpush1.bf16.msra.mxu0 %v882
    %1012 = vmatprep.subr.bf16.mxu0 %v885
    %1013 = vmatpush1.bf16.msra.mxu0 %v884
    %1014 = vmatprep.subr.bf16.mxu0 %v887
    %1015 = vmatpush1.bf16.msra.mxu0 %v886
    %1016 = vmatprep.subr.bf16.mxu0 %v889
    %1017 = vmatpush1.bf16.msra.mxu0 %v888
    %1018 = vmatprep.subr.bf16.mxu0 %v891
    %1019 = vmatpush1.bf16.msra.mxu0 %v890
    %1020 = vmatprep.subr.bf16.mxu0 %v893
    %1021 = vmatpush1.bf16.msra.mxu0 %v892
    %1022 = vmatprep.subr.bf16.mxu0 %v895
    %1023 = vmatpush1.bf16.msra.mxu0 %v894
    %1024 = vmatprep.subr.bf16.mxu0 %v897
    %1025 = vmatpush1.bf16.msra.mxu0 %v896
    %1026 = vmatprep.subr.bf16.mxu0 %v899
    %1027 = vmatpush1.bf16.msra.mxu0 %v898
    %1028 = vmatprep.subr.bf16.mxu0 %v901
    %1029 = vmatpush1.bf16.msra.mxu0 %v900
    %1030 = vmatprep.subr.bf16.mxu0 %v903
    %1031 = vmatpush1.bf16.msra.mxu0 %v902
    %1032 = vmatprep.subr.bf16.mxu0 %v905
    %1033 = vmatpush1.bf16.msra.mxu0 %v904
    %1034 = vmatprep.subr.bf16.mxu0 %v907
    %1035 = vmatpush1.bf16.msra.mxu0 %v906
    %1036 = vmatprep.subr.bf16.mxu0 %v909
    %1037 = vmatpush1.bf16.msra.mxu0 %v908
    %1038 = vmatprep.subr.bf16.mxu0 %v911
    %1039 = vmatpush1.bf16.msra.mxu0 %v910
    %1040 = vmatprep.subr.bf16.mxu0 %v913
    %1041 = vmatpush1.bf16.msra.mxu0 %v912
    %1042 = vmatprep.mubr.bf16.mxu0 %v611
    %1043 = vmatmul.mubr.bf16.gmra.mrb[0].mxu0 %v610
    %v1044 = vpop.f32.mrb[0].mxu0
    %v1045 = vadd.f32 %v683, %v1044
    %v1046 = vpop.f32.mrb[0].mxu0
    %v1047 = vadd.f32 %v687, %v1046
    %v1048 = vpop.f32.mrb[0].mxu0
    %v1049 = vpop.f32.mrb[0].mxu0
    %1050 = vdwg.mxu0
    %1051 = vmatprep.subr.bf16.mxu0 %v915
    %1052 = vmatpush1.bf16.msra.mxu0 %v914
    %1053 = vmatprep.subr.bf16.mxu0 %v917
    %1054 = vmatpush1.bf16.msra.mxu0 %v916
    %1055 = vmatprep.subr.bf16.mxu0 %v919
    %1056 = vmatpush1.bf16.msra.mxu0 %v918
    %1057 = vmatprep.subr.bf16.mxu0 %v921
    %1058 = vmatpush1.bf16.msra.mxu0 %v920
    %1059 = vmatprep.subr.bf16.mxu0 %v923
    %1060 = vmatpush1.bf16.msra.mxu0 %v922
    %1061 = vmatprep.subr.bf16.mxu0 %v925
    %1062 = vmatpush1.bf16.msra.mxu0 %v924
    %1063 = vmatprep.subr.bf16.mxu0 %v927
    %1064 = vmatpush1.bf16.msra.mxu0 %v926
    %1065 = vmatprep.subr.bf16.mxu0 %v929
    %1066 = vmatpush1.bf16.msra.mxu0 %v928
    %1067 = vmatprep.subr.bf16.mxu0 %v931
    %1068 = vmatpush1.bf16.msra.mxu0 %v930
    %1069 = vmatprep.subr.bf16.mxu0 %v933
    %1070 = vmatpush1.bf16.msra.mxu0 %v932
    %1071 = vmatprep.subr.bf16.mxu0 %v935
    %1072 = vmatpush1.bf16.msra.mxu0 %v934
    %1073 = vmatprep.subr.bf16.mxu0 %v937
    %1074 = vmatpush1.bf16.msra.mxu0 %v936
    %1075 = vmatprep.subr.bf16.mxu0 %v939
    %1076 = vmatpush1.bf16.msra.mxu0 %v938
    %1077 = vmatprep.subr.bf16.mxu0 %v941
    %1078 = vmatpush1.bf16.msra.mxu0 %v940
    %1079 = vmatprep.subr.bf16.mxu0 %v943
    %1080 = vmatpush1.bf16.msra.mxu0 %v942
    %1081 = vmatprep.subr.bf16.mxu0 %v945
    %1082 = vmatpush1.bf16.msra.mxu0 %v944
    %1083 = vmatprep.mubr.bf16.mxu0 %v613
    %1084 = vmatmul.mubr.bf16.gmra.mrb[0].mxu0 %v612
    %v1085 = vpop.f32.mrb[0].mxu0
    %v1086 = vadd.f32 %v1045, %v1085
    %v1087 = vpop.f32.mrb[0].mxu0
    %v1088 = vadd.f32 %v1047, %v1087
    %v1089 = vpop.f32.mrb[0].mxu0
    %v1090 = vpop.f32.mrb[0].mxu0
    %1091 = vdwg.mxu0
    %vm1092 = vcmp.gt.f32.partialorder %v1086, 0.0
    %vm1093 = vcmp.gt.f32.partialorder %v1088, 0.0
    %v1094 = vmul.f32 %v1086, 0.2
    %v1095 = vmul.f32 %v1088, 0.2
    %v1096 = vsel %vm1092, %v1086, %v1094
    %v1097 = vsel %vm1093, %v1088, %v1095
    %v1098 = vld [vmem:[#allocation12] sm:$0x3]
    %v1100 = vlaneseq
    %v1101 = vshrl.u32 %v1100, 7
    %v1102 = vsub.s32 0, %v1101
    %v1103 = vrot.slane %v1098, %v1102
    %v1104 = vlaneseq
    %v1105 = vshrl.u32 %v1104, 7
    %v1106 = vsub.s32 1, %v1105
    %v1107 = vrot.slane %v1098, %v1106
    %v1110 = vmul.f32 %v1096, %v1103
    %v1111 = vmul.f32 %v1097, %v1107
    %v1112 = vadd.f32 %v1110, %v1111
    %1113 = vadd.xlane.f32.xlu0 %v1112
    %v1114 = vpop.xlane.xlu0 %1113
    %s1115 = sld [smem:[#allocation2]]
    %v1116 = vstv %s1115
    %v1117 = vadd.f32 %v1114, %v1116
    %v1118 = vsub.f32 0.0, %v1117
    %v1119 = vmul.f32 %v1118, 1.442695
    %v1120 = vpow.pop %v1119
    %v1121 = vadd.f32 %v1120, 1.0
    %v1122 = vrcp.pop %v1121
    %1123 = vst [vmem:[#allocation14] sm:$0xff] %v1122
    // Predicated region
    $region54: #{tpu_custom_call.1} parent=1 // pred_check
      _
    $region55: #{tpu_custom_call.1} parent=1 // pred_check_branch
      %1125 = sbr.rel (0) target = $region57
    $region56: #{tpu_custom_call.1} parent=1 // pred_region
      %s1127 = ssub.s32 128, 128
      %1128 = vsyncadd [#allocation5], %s1127
      %s1130 = sshll.u32 [#allocation14], 4
      %s1131 = int_to_ptr.vmem [resolvable:$true] %s1130
      %1133 = dma.vmem_to_hbm [thread:$0]  %s1131, 128, %s7, [#allocation5]
    $region57: #{tpu_custom_call.1} parent=1 // pred_fallthru
      _
    // Predicated region
    $region58: #{tpu_custom_call.1} parent=1 // pred_check
      _
    $region59: #{tpu_custom_call.1} parent=1 // pred_check_branch
      %1135 = sbr.rel (0) target = $region61
    $region60: #{tpu_custom_call.1} parent=1 // pred_region
      %1136 = dma.done [#allocation5], 128
    $region61: #{tpu_custom_call.1} parent=1 // pred_fallthru
      _
    %1137 = vsyncpa [#allocation4], 1
    %1138 = vsyncpa [#allocation7], 1
    %1139 = vsyncpa [#allocation10], 1
    %1140 = vsyncpa [#allocation13], 1
    %1141 = vsyncpa [#allocation5], 1

</llo_original>
